<compile_context>
chip_gen: v6e
topology: v6e:2x2x1
jax: 0.10.0
libtpu: 0.0.40
codegen_flags: <defaults>
</compile_context>

<pallas_src>
import jax
import jax.numpy as jnp
from jax import lax
from jax.experimental import pallas as pl
from jax.experimental.pallas import tpu as pltpu


# ---------------------------------------------------------------------------
# Kernel
# ---------------------------------------------------------------------------
def _batch_linear_kernel(x_ref, w_ref, b_ref, o_ref):
    x = x_ref[...]   # (TB, in_ch, tn)   -- N on lanes (lane-dense)
    w = w_ref[...]   # (TB, out_ch, in_ch)
    b = b_ref[...]   # (TB, out_ch, 1)

    # Match the f32 reference precision; for bf16 inputs DEFAULT is exact anyway.
    prec = lax.Precision.HIGHEST if x.dtype == jnp.float32 else lax.Precision.DEFAULT

    # out[b] = W[b] @ x[b] : contract in_ch directly, batched over TB rows,
    # f32 accumulation on the MXU.
    y = jnp.einsum(
        "boi,bin->bon", w, x,
        precision=prec,
        preferred_element_type=jnp.float32,
    )                                   # (TB, out_ch, tn)
    y = y + b.astype(jnp.float32)       # bias broadcast along lanes
    o_ref[...] = y.astype(o_ref.dtype)


# ---------------------------------------------------------------------------
# Tiling heuristics
# ---------------------------------------------------------------------------
def _physical_vmem_bytes():
    """Per-core VMEM capacity; conservative fallback if the query fails."""
    try:
        info = pltpu.get_tpu_info()
        v = getattr(info, "vmem_capacity_bytes", None)
        if v:
            return int(v)
    except Exception:
        pass
    return 64 * 1024 * 1024  # v7x-sized fallback: safe on every generation


def _sublane_pad(c, itemsize):
    """Pad a channel count to a full sublane group (8 * packing rows)."""
    packing = max(1, 4 // max(1, itemsize))   # f32 -> 1, bf16 -> 2, int8 -> 4
    mult = 8 * packing
    return max(mult, -(-c // mult) * mult)


def _pick_tiles(B, N, in_ch, out_ch, itemsize, budget):
    """Choose (TB, tn): batch rows per step and N-lane tile per step."""
    lane = 128
    pad_in = _sublane_pad(in_ch, itemsize)
    pad_out = _sublane_pad(out_ch, itemsize)
    n_pad = -(-N // lane) * lane

    # Double-buffered x + out tiles for one batch row over all of N, plus the
    # (lane-padded) weight and bias blocks.
    per_batch_full_n = 2 * itemsize * ((pad_in + pad_out) * n_pad + 2 * pad_out * lane)

    if per_batch_full_n <= budget:
        # Small/medium-N regime: take all of N per step and pack TB batch rows
        # so each pipeline step moves >= ~2 MiB of real data (amortizes the
        # ~0.35 us per-step overhead).
        tb_fit = max(1, budget // per_batch_full_n)
        tb_want = max(1, -(-(4 * 1024 * 1024) // per_batch_full_n))
        tb = int(min(B, tb_fit, tb_want))
        # Prefer a divisor of B (no ragged edge block) if one is nearby;
        # otherwise keep tb and rely on Pallas' padded-edge masking.
        for cand in range(tb, max(1, (2 * tb) // 3) - 1, -1):
            if B % cand == 0:
                tb = cand
                break
        return tb, N

    # Large-N regime: one batch row per step, the biggest lane tile that fits
    # the budget (no artificial cap).
    col_bytes = 2 * itemsize * (pad_in + pad_out)
    tn = (budget // col_bytes) // lane * lane
    tn = max(lane, min(tn, (N // lane) * lane))
    return 1, tn


# ---------------------------------------------------------------------------
# Wrappers
# ---------------------------------------------------------------------------
def batch_linear_channel_major(x_cn, weights, biases, *, block_n=None, block_b=None):
    """Channel-major BatchLinear (no wrapper transposes on the big tensors).

    x_cn:    (B, in_ch, N)   -- N on the last (lane) axis
    weights: (B, out_ch, in_ch)
    biases:  (B, 1, out_ch)
    returns  (B, out_ch, N)

    Chained BatchLinear layers should stay in this layout and only transpose
    at the MLP boundary.
    """
    B, in_ch, N = x_cn.shape
    _, out_ch, _ = weights.shape
    itemsize = jnp.dtype(x_cn.dtype).itemsize

    phys = _physical_vmem_bytes()
    budget = max(16 * 1024 * 1024, (phys * 3) // 8)      # 48 MiB v5e/v6e, 24 MiB v7x
    vmem_limit = int(min(phys // 2, 100 * 1024 * 1024))  # 64 MiB v5e/v6e, 32 MiB v7x

    auto_tb, auto_tn = _pick_tiles(B, N, in_ch, out_ch, itemsize, budget)
    tb = int(min(B, block_b if block_b is not None else auto_tb))
    tn = int(min(N, block_n if block_n is not None else auto_tn))

    num_bb = pl.cdiv(B, tb)
    num_nt = pl.cdiv(N, tn)

    # Leading grid axis is the one that gets sharded across TensorCores on
    # v7x, so put the axis with more blocks first (handles B=1 workloads).
    if num_bb >= num_nt:
        grid = (num_bb, num_nt)

        def _bn(i, j):
            return i, j
    else:
        grid = (num_nt, num_bb)

        def _bn(i, j):
            return j, i

    def x_map(i, j):
        b, n = _bn(i, j)
        return (b, 0, n)

    def wb_map(i, j):
        b, _ = _bn(i, j)
        return (b, 0, 0)

    b_cn = jnp.swapaxes(biases, 1, 2)  # (B, out_ch, 1) -- tiny, negligible cost

    out_cn = pl.pallas_call(
        _batch_linear_kernel,
        out_shape=jax.ShapeDtypeStruct((B, out_ch, N), x_cn.dtype),
        grid_spec=pltpu.PrefetchScalarGridSpec(
            num_scalar_prefetch=0,
            grid=grid,
            in_specs=[
                # activations: TB batch rows, one lane-dense N tile
                pl.BlockSpec((tb, in_ch, tn), x_map),
                # per-batch weights / bias: block index depends only on b
                pl.BlockSpec((tb, out_ch, in_ch), wb_map),
                pl.BlockSpec((tb, out_ch, 1), wb_map),
            ],
            out_specs=pl.BlockSpec((tb, out_ch, tn), x_map),
        ),
        compiler_params=pltpu.CompilerParams(
            dimension_semantics=("parallel", "parallel"),
            vmem_limit_bytes=vmem_limit,
        ),
    )(x_cn, weights, b_cn)

    return out_cn


def batch_linear(x, weights, biases, *, block_n=None, block_b=None):
    """Row-major BatchLinear (matches the PyTorch module's layout).

    x:       (B, N, in_ch)
    weights: (B, out_ch, in_ch)
    biases:  (B, 1, out_ch)
    returns  (B, N, out_ch), dtype of x.

    Note: the two swapaxes below are whole extra HBM passes over x/out; callers
    that can produce/consume channel-major data should use
    batch_linear_channel_major directly.
    """
    x_cn = jnp.swapaxes(x, 1, 2)                                    # (B, in_ch, N)
    out_cn = batch_linear_channel_major(x_cn, weights, biases,
                                        block_n=block_n, block_b=block_b)
    return jnp.swapaxes(out_cn, 1, 2)                               # (B, N, out_ch)


def batch_linear_reference(x, weights, biases):
    """Pure-JAX reference matching the PyTorch forward."""
    return jnp.matmul(x, jnp.swapaxes(weights, -1, -2),
                      precision=lax.Precision.HIGHEST) + biases


# ---------------------------------------------------------------------------
# Self-test
# ---------------------------------------------------------------------------
if __name__ == "__main__":
    key = jax.random.PRNGKey(0)
    kx, kw, kb = jax.random.split(key, 3)

    # --- small shapes implied by the forward ---
    B, N, in_ch, out_ch = 2, 16, 4, 8
    x = jax.random.normal(kx, (B, N, in_ch), dtype=jnp.float32)
    w = jax.random.normal(kw, (B, out_ch, in_ch), dtype=jnp.float32)
    b = jax.random.normal(kb, (B, 1, out_ch), dtype=jnp.float32)

    out = jax.block_until_ready(batch_linear(x, w, b))
    ref = batch_linear_reference(x, w, b)
    assert out.shape == (B, N, out_ch), out.shape
    assert jnp.allclose(out, ref, rtol=1e-4, atol=1e-4), "f32 mismatch vs reference"

    # --- multi-tile grid over N (large-N style path, explicit overrides) ---
    B2, N2, ic2, oc2 = 2, 1024, 32, 16
    k1, k2, k3 = jax.random.split(jax.random.PRNGKey(1), 3)
    x2 = jax.random.normal(k1, (B2, N2, ic2), dtype=jnp.float32)
    w2 = jax.random.normal(k2, (B2, oc2, ic2), dtype=jnp.float32)
    b2 = jax.random.normal(k3, (B2, 1, oc2), dtype=jnp.float32)

    out2 = jax.block_until_ready(batch_linear(x2, w2, b2, block_n=256, block_b=1))
    ref2 = batch_linear_reference(x2, w2, b2)
    assert jnp.allclose(out2, ref2, rtol=1e-4, atol=1e-4), "tiled f32 mismatch"

    # --- channel-major fast path (no wrapper transposes) ---
    out_cn = jax.block_until_ready(
        batch_linear_channel_major(jnp.swapaxes(x2, 1, 2), w2, b2))
    assert jnp.allclose(jnp.swapaxes(out_cn, 1, 2), ref2, rtol=1e-4, atol=1e-4), \
        "channel-major f32 mismatch"

    # --- batch-packed path (small-N, many batch rows per grid step) ---
    B3, N3, ic3, oc3 = 16, 64, 8, 8
    k4, k5, k6 = jax.random.split(jax.random.PRNGKey(2), 3)
    x3 = jax.random.normal(k4, (B3, N3, ic3), dtype=jnp.float32)
    w3 = jax.random.normal(k5, (B3, oc3, ic3), dtype=jnp.float32)
    b3 = jax.random.normal(k6, (B3, 1, oc3), dtype=jnp.float32)

    out3 = jax.block_until_ready(batch_linear(x3, w3, b3, block_b=4))
    ref3 = batch_linear_reference(x3, w3, b3)
    assert jnp.allclose(out3, ref3, rtol=1e-4, atol=1e-4), "batch-packed f32 mismatch"

    # --- bf16 inputs (halved HBM traffic), f32 accumulation inside the kernel ---
    xb = x2.astype(jnp.bfloat16)
    wb = w2.astype(jnp.bfloat16)
    bb = b2.astype(jnp.bfloat16)
    out_bf = jax.block_until_ready(batch_linear(xb, wb, bb, block_n=256, block_b=1))
    ref_bf = batch_linear_reference(xb.astype(jnp.float32),
                                    wb.astype(jnp.float32),
                                    bb.astype(jnp.float32))
    assert jnp.allclose(out_bf.astype(jnp.float32), ref_bf, rtol=2e-2, atol=1e-2), \
        "bf16 mismatch vs reference"

    print("KERNEL_OK")
</pallas_src>

<mosaic_0001>
module attributes {stable_mosaic.version = 11 : i64} {
  func.func @_batch_linear_kernel(%arg0: i32, %arg1: i32, %arg2: memref<2x4x16xf32, #tpu.memory_space<vmem>>, %arg3: memref<2x8x4xf32, #tpu.memory_space<vmem>>, %arg4: memref<2x8x1xf32, #tpu.memory_space<vmem>>, %arg5: memref<2x8x16xf32, #tpu.memory_space<vmem>>) attributes {dimension_semantics = [#tpu.dimension_semantics<parallel>, #tpu.dimension_semantics<parallel>], iteration_bounds = array<i64: 1, 1>, scalar_prefetch = 0 : i64, scratch_operands = 0 : i64, tpu.core_type = #tpu.core_type<tc>, window_params = [{transform_indices = @transform_0, window_bounds = array<i64: 2, 4, 16>}, {transform_indices = @transform_1, window_bounds = array<i64: 2, 8, 4>}, {transform_indices = @transform_2, window_bounds = array<i64: 2, 8, 1>}, {transform_indices = @transform_3, window_bounds = array<i64: 2, 8, 16>}]} {
    %c0 = arith.constant 0 : index
    %c0_0 = arith.constant 0 : index
    %c0_1 = arith.constant 0 : index
    %0 = vector.load %arg2[%c0, %c0_0, %c0_1] : memref<2x4x16xf32, #tpu.memory_space<vmem>>, vector<2x4x16xf32>
    %c0_2 = arith.constant 0 : index
    %c0_3 = arith.constant 0 : index
    %c0_4 = arith.constant 0 : index
    %1 = vector.load %arg3[%c0_2, %c0_3, %c0_4] : memref<2x8x4xf32, #tpu.memory_space<vmem>>, vector<2x8x4xf32>
    %c0_5 = arith.constant 0 : index
    %c0_6 = arith.constant 0 : index
    %c0_7 = arith.constant 0 : index
    %2 = vector.load %arg4[%c0_5, %c0_6, %c0_7] : memref<2x8x1xf32, #tpu.memory_space<vmem>>, vector<2x8x1xf32>
    "tpu.trace_start"() <{level = 10 : i32, message = "boi,bin->bon"}> : () -> ()
    %cst = arith.constant dense<0.000000e+00> : vector<2x8x16xf32>
    %3 = tpu.matmul %1, %0, %cst {dimension_numbers = #tpu.dot_dimension_numbers<[2], [1], [1], [2], [0, 0, 0, 1, 1, 2], [0], [0]>, precision = #tpu.contract_precision<fp32>} : vector<2x8x4xf32>, vector<2x4x16xf32>, vector<2x8x16xf32> -> vector<2x8x16xf32>
    "tpu.trace_stop"() : () -> ()
    %4 = vector.broadcast %2 : vector<2x8x1xf32> to vector<2x8x16xf32>
    %5 = arith.addf %3, %4 : vector<2x8x16xf32>
    %c0_8 = arith.constant 0 : index
    %c0_9 = arith.constant 0 : index
    %c0_10 = arith.constant 0 : index
    %6 = vector.load %arg5[%c0_8, %c0_9, %c0_10] : memref<2x8x16xf32, #tpu.memory_space<vmem>>, vector<2x8x16xf32>
    tpu.vector_store %arg5[%c0_8, %c0_9, %c0_10], %5 {strides = array<i32>} : memref<2x8x16xf32, #tpu.memory_space<vmem>>, vector<2x8x16xf32>,
    return
  }
  func.func @transform_0(%arg0: i32, %arg1: i32) -> (i32, i32, i32) {
    %c0_i32 = arith.constant 0 : i32
    %c0_i32_0 = arith.constant 0 : i32
    return %arg0, %c0_i32, %arg1 : i32, i32, i32
  }
  func.func @transform_1(%arg0: i32, %arg1: i32) -> (i32, i32, i32) {
    %c0_i32 = arith.constant 0 : i32
    %c0_i32_0 = arith.constant 0 : i32
    %c0_i32_1 = arith.constant 0 : i32
    return %arg0, %c0_i32, %c0_i32_0 : i32, i32, i32
  }
  func.func @transform_2(%arg0: i32, %arg1: i32) -> (i32, i32, i32) {
    %c0_i32 = arith.constant 0 : i32
    %c0_i32_0 = arith.constant 0 : i32
    %c0_i32_1 = arith.constant 0 : i32
    return %arg0, %c0_i32, %c0_i32_0 : i32, i32, i32
  }
  func.func @transform_3(%arg0: i32, %arg1: i32) -> (i32, i32, i32) {
    %c0_i32 = arith.constant 0 : i32
    %c0_i32_0 = arith.constant 0 : i32
    return %arg0, %c0_i32, %arg1 : i32, i32, i32
  }
}

</mosaic_0001>

<llo_original>
// kernel: tpu_custom_call.1
$region0: #{tpu_custom_call.1}
  #allocation0 [shape = 'u32[]', space=smem, size = 0x4, offset = 0x4, fixed_abs, tag = 'smem constant byte address 0x4 - core index']
  #allocation1 [shape = 'u32[144,128]{1,0:T(1,128)}', space=vmem, size = 0x12000, scoped, tag = 'internal scratch']
  %s0 = inlined_call_operand.vmem [shape: f32[2,4,16], index: 0, kind: input, shape index: {}]
  %s1 = inlined_call_operand.vmem [shape: f32[2,8,4], index: 1, kind: input, shape index: {}]
  %s2 = inlined_call_operand.vmem [shape: f32[2,8,1], index: 2, kind: input, shape index: {}]
  %s3 = inlined_call_operand.hbm [shape: f32[2,8,16], index: 3, kind: output, shape index: {}]
  %s4 = sld [smem:[#allocation0]]
  $region22: #{tpu_custom_call.1} parent=0
    _
  %s6 = ssub.s32 1, %s4
  %s7 = scalar_select 0, %s6, %s4
  $region1: #{tpu_custom_call.1} parent=0
    #allocation2 [shape = 'u8[8192]{0}', space=vmem, size = 0x2000, scoped, tag = 'output window, operand 0, single buffered']
    #allocation3 [shape = 's32[1]{0}', space=sflag, size = 0x4, scoped, tag = 'scoped memory for tpu_custom_call.1']
    %8 = vsyncpa [#allocation3], 0
    // Predicated region
    $region2: #{tpu_custom_call.1} parent=1 // pred_check
      _
    $region3: #{tpu_custom_call.1} parent=1 // pred_check_branch
      %10 = sbr.rel (0) target = $region5
    $region4: #{tpu_custom_call.1} parent=1 // pred_region
      _
    $region5: #{tpu_custom_call.1} parent=1 // pred_fallthru
      _
    // Predicated region
    $region6: #{tpu_custom_call.1} parent=1 // pred_check
      _
    $region7: #{tpu_custom_call.1} parent=1 // pred_check_branch
      %12 = sbr.rel (0) target = $region9
    $region8: #{tpu_custom_call.1} parent=1 // pred_region
      _
    $region9: #{tpu_custom_call.1} parent=1 // pred_fallthru
      _
    // Predicated region
    $region10: #{tpu_custom_call.1} parent=1 // pred_check
      _
    $region11: #{tpu_custom_call.1} parent=1 // pred_check_branch
      %14 = sbr.rel (0) target = $region13
    $region12: #{tpu_custom_call.1} parent=1 // pred_region
      _
    $region13: #{tpu_custom_call.1} parent=1 // pred_fallthru
      _
    %v15 = vld [vmem:[%s0] sm:$0xf]
    %v16 = vld [vmem:[%s0 + $0x4] sm:$0xf]
    %v17 = vld [vmem:[%s1] sm:$0xff]
    %v18 = vld [vmem:[%s1 + $0x8] sm:$0xff]
    %v19 = vld [vmem:[%s2] sm:$0xff]
    %v20 = vld [vmem:[%s2 + $0x8] sm:$0xff]
    %22 = vset.pattern.permute.xlu0 0
    %23 = vperm.xlu0 %22, %v19
    %v24 = vpop.permute.xlu0 %23
    %27 = vset.pattern.permute.xlu0 0
    %28 = vperm.xlu0 %27, %v20
    %v29 = vpop.permute.xlu0 %28
    %vm31 = vcmask 31744
    %v33 = vsel %vm31, %v17, 0
    %vm35 = vcmask 1043456
    %v37 = vsel %vm35, %v15, 0
    %39 = vmatprep.subr.mxu0 0.0
    %40 = vmatpush1.msra.mxu0 0.0
    %41 = vmatprep.subr.mxu0 0.0
    %42 = vmatpush1.msra.mxu0 0.0
    %43 = vmatprep.subr.mxu0 0.0
    %44 = vmatpush1.msra.mxu0 0.0
    %45 = vmatprep.subr.mxu0 0.0
    %46 = vmatpush1.msra.mxu0 0.0
    %47 = vmatprep.subr.mxu0 0.0
    %48 = vmatpush1.msra.mxu0 0.0
    %49 = vmatprep.subr.mxu0 0.0
    %50 = vmatpush1.msra.mxu0 0.0
    %51 = vmatprep.subr.mxu0 0.0
    %52 = vmatpush1.msra.mxu0 0.0
    %53 = vmatprep.subr.mxu0 0.0
    %54 = vmatpush1.msra.mxu0 0.0
    %55 = vmatprep.subr.mxu0 0.0
    %56 = vmatpush1.msra.mxu0 0.0
    %57 = vmatprep.subr.mxu0 0.0
    %58 = vmatpush1.msra.mxu0 0.0
    %59 = vmatprep.subr.mxu0 0.0
    %60 = vmatpush1.msra.mxu0 0.0
    %61 = vmatprep.subr.mxu0 0.0
    %62 = vmatpush1.msra.mxu0 0.0
    %63 = vmatprep.subr.mxu0 0.0
    %64 = vmatpush1.msra.mxu0 0.0
    %65 = vmatprep.subr.mxu0 0.0
    %66 = vmatpush1.msra.mxu0 0.0
    %67 = vmatprep.subr.mxu0 0.0
    %68 = vmatpush1.msra.mxu0 0.0
    %69 = vmatprep.subr.mxu0 0.0
    %v70 = vand.u32 %v37, 4294901760
    %71 = vmatpush1.msra.mxu0 %v70
    %72 = vmatprep.subr.mxu0 0.0
    %73 = vmatpush2.msra.mxu0 0.0
    %74 = vmatprep.subr.mxu0 0.0
    %75 = vmatpush2.msra.mxu0 0.0
    %76 = vmatprep.subr.mxu0 0.0
    %77 = vmatpush2.msra.mxu0 0.0
    %78 = vmatprep.subr.mxu0 0.0
    %79 = vmatpush2.msra.mxu0 0.0
    %80 = vmatprep.subr.mxu0 0.0
    %81 = vmatpush2.msra.mxu0 0.0
    %82 = vmatprep.subr.mxu0 0.0
    %83 = vmatpush2.msra.mxu0 0.0
    %84 = vmatprep.subr.mxu0 0.0
    %85 = vmatpush2.msra.mxu0 0.0
    %86 = vmatprep.subr.mxu0 0.0
    %87 = vmatpush2.msra.mxu0 0.0
    %88 = vmatprep.subr.mxu0 0.0
    %89 = vmatpush2.msra.mxu0 0.0
    %90 = vmatprep.subr.mxu0 0.0
    %91 = vmatpush2.msra.mxu0 0.0
    %92 = vmatprep.subr.mxu0 0.0
    %93 = vmatpush2.msra.mxu0 0.0
    %94 = vmatprep.subr.mxu0 0.0
    %95 = vmatpush2.msra.mxu0 0.0
    %96 = vmatprep.subr.mxu0 0.0
    %97 = vmatpush2.msra.mxu0 0.0
    %98 = vmatprep.subr.mxu0 0.0
    %99 = vmatpush2.msra.mxu0 0.0
    %100 = vmatprep.subr.mxu0 0.0
    %101 = vmatpush2.msra.mxu0 0.0
    %102 = vmatprep.subr.mxu0 0.0
    %103 = vmatpush2.msra.mxu0 0.0
    %104 = vmatprep.mubr.f32.mxu0 0.0
    %v105 = vand.u32 %v33, 4294901760
    %v106 = vsub.f32 %v33, %v105
    %v107 = vand.u32 %v106, 4294901760
    %v108 = vsub.f32 %v106, %v107
    %v109 = vand.u32 %v108, 4294901760
    %110 = vmatmul.mubr.f32.gmra.mxu0 %v109
    %v111 = vpop.f32.mrf.mxu0
    %v112 = vadd.f32 %v24, %v111
    %v113 = vpop.f32.mrf.mxu0
    %114 = vdwg.mxu0
    %115 = vmatprep.subr.mxu0 0.0
    %116 = vmatpush1.msra.mxu0 0.0
    %117 = vmatprep.subr.mxu0 0.0
    %118 = vmatpush1.msra.mxu0 0.0
    %119 = vmatprep.subr.mxu0 0.0
    %120 = vmatpush1.msra.mxu0 0.0
    %121 = vmatprep.subr.mxu0 0.0
    %122 = vmatpush1.msra.mxu0 0.0
    %123 = vmatprep.subr.mxu0 0.0
    %124 = vmatpush1.msra.mxu0 0.0
    %125 = vmatprep.subr.mxu0 0.0
    %126 = vmatpush1.msra.mxu0 0.0
    %127 = vmatprep.subr.mxu0 0.0
    %128 = vmatpush1.msra.mxu0 0.0
    %129 = vmatprep.subr.mxu0 0.0
    %130 = vmatpush1.msra.mxu0 0.0
    %131 = vmatprep.subr.mxu0 0.0
    %132 = vmatpush1.msra.mxu0 0.0
    %133 = vmatprep.subr.mxu0 0.0
    %134 = vmatpush1.msra.mxu0 0.0
    %135 = vmatprep.subr.mxu0 0.0
    %136 = vmatpush1.msra.mxu0 0.0
    %137 = vmatprep.subr.mxu0 0.0
    %138 = vmatpush1.msra.mxu0 0.0
    %139 = vmatprep.subr.mxu0 0.0
    %140 = vmatpush1.msra.mxu0 0.0
    %141 = vmatprep.subr.mxu0 0.0
    %142 = vmatpush1.msra.mxu0 0.0
    %143 = vmatprep.subr.mxu0 0.0
    %144 = vmatpush1.msra.mxu0 0.0
    %145 = vmatprep.subr.mxu0 0.0
    %v146 = vand.u32 %v37, 4294901760
    %v147 = vsub.f32 %v37, %v146
    %v148 = vand.u32 %v147, 4294901760
    %v149 = vsub.f32 %v147, %v148
    %v150 = vand.u32 %v149, 4294901760
    %151 = vmatpush1.msra.mxu0 %v150
    %152 = vmatprep.subr.mxu0 0.0
    %153 = vmatpush2.msra.mxu0 0.0
    %154 = vmatprep.subr.mxu0 0.0
    %155 = vmatpush2.msra.mxu0 0.0
    %156 = vmatprep.subr.mxu0 0.0
    %157 = vmatpush2.msra.mxu0 0.0
    %158 = vmatprep.subr.mxu0 0.0
    %159 = vmatpush2.msra.mxu0 0.0
    %160 = vmatprep.subr.mxu0 0.0
    %161 = vmatpush2.msra.mxu0 0.0
    %162 = vmatprep.subr.mxu0 0.0
    %163 = vmatpush2.msra.mxu0 0.0
    %164 = vmatprep.subr.mxu0 0.0
    %165 = vmatpush2.msra.mxu0 0.0
    %166 = vmatprep.subr.mxu0 0.0
    %167 = vmatpush2.msra.mxu0 0.0
    %168 = vmatprep.subr.mxu0 0.0
    %169 = vmatpush2.msra.mxu0 0.0
    %170 = vmatprep.subr.mxu0 0.0
    %171 = vmatpush2.msra.mxu0 0.0
    %172 = vmatprep.subr.mxu0 0.0
    %173 = vmatpush2.msra.mxu0 0.0
    %174 = vmatprep.subr.mxu0 0.0
    %175 = vmatpush2.msra.mxu0 0.0
    %176 = vmatprep.subr.mxu0 0.0
    %177 = vmatpush2.msra.mxu0 0.0
    %178 = vmatprep.subr.mxu0 0.0
    %179 = vmatpush2.msra.mxu0 0.0
    %180 = vmatprep.subr.mxu0 0.0
    %181 = vmatpush2.msra.mxu0 0.0
    %182 = vmatprep.subr.mxu0 0.0
    %183 = vmatpush2.msra.mxu0 0.0
    %184 = vmatprep.mubr.f32.mxu0 0.0
    %v185 = vand.u32 %v33, 4294901760
    %186 = vmatmul.mubr.f32.gmra.mxu0 %v185
    %v187 = vpop.f32.mrf.mxu0
    %v188 = vadd.f32 %v112, %v187
    %v189 = vpop.f32.mrf.mxu0
    %190 = vdwg.mxu0
    %191 = vmatprep.subr.mxu0 0.0
    %192 = vmatpush1.msra.mxu0 0.0
    %193 = vmatprep.subr.mxu0 0.0
    %194 = vmatpush1.msra.mxu0 0.0
    %195 = vmatprep.subr.mxu0 0.0
    %196 = vmatpush1.msra.mxu0 0.0
    %197 = vmatprep.subr.mxu0 0.0
    %198 = vmatpush1.msra.mxu0 0.0
    %199 = vmatprep.subr.mxu0 0.0
    %200 = vmatpush1.msra.mxu0 0.0
    %201 = vmatprep.subr.mxu0 0.0
    %202 = vmatpush1.msra.mxu0 0.0
    %203 = vmatprep.subr.mxu0 0.0
    %204 = vmatpush1.msra.mxu0 0.0
    %205 = vmatprep.subr.mxu0 0.0
    %206 = vmatpush1.msra.mxu0 0.0
    %207 = vmatprep.subr.mxu0 0.0
    %208 = vmatpush1.msra.mxu0 0.0
    %209 = vmatprep.subr.mxu0 0.0
    %210 = vmatpush1.msra.mxu0 0.0
    %211 = vmatprep.subr.mxu0 0.0
    %212 = vmatpush1.msra.mxu0 0.0
    %213 = vmatprep.subr.mxu0 0.0
    %214 = vmatpush1.msra.mxu0 0.0
    %215 = vmatprep.subr.mxu0 0.0
    %216 = vmatpush1.msra.mxu0 0.0
    %217 = vmatprep.subr.mxu0 0.0
    %218 = vmatpush1.msra.mxu0 0.0
    %219 = vmatprep.subr.mxu0 0.0
    %220 = vmatpush1.msra.mxu0 0.0
    %221 = vmatprep.subr.mxu0 0.0
    %v222 = vand.u32 %v37, 4294901760
    %v223 = vsub.f32 %v37, %v222
    %224 = vmatpush1.msra.mxu0 %v223
    %225 = vmatprep.subr.mxu0 0.0
    %226 = vmatpush2.msra.mxu0 0.0
    %227 = vmatprep.subr.mxu0 0.0
    %228 = vmatpush2.msra.mxu0 0.0
    %229 = vmatprep.subr.mxu0 0.0
    %230 = vmatpush2.msra.mxu0 0.0
    %231 = vmatprep.subr.mxu0 0.0
    %232 = vmatpush2.msra.mxu0 0.0
    %233 = vmatprep.subr.mxu0 0.0
    %234 = vmatpush2.msra.mxu0 0.0
    %235 = vmatprep.subr.mxu0 0.0
    %236 = vmatpush2.msra.mxu0 0.0
    %237 = vmatprep.subr.mxu0 0.0
    %238 = vmatpush2.msra.mxu0 0.0
    %239 = vmatprep.subr.mxu0 0.0
    %240 = vmatpush2.msra.mxu0 0.0
    %241 = vmatprep.subr.mxu0 0.0
    %242 = vmatpush2.msra.mxu0 0.0
    %243 = vmatprep.subr.mxu0 0.0
    %244 = vmatpush2.msra.mxu0 0.0
    %245 = vmatprep.subr.mxu0 0.0
    %246 = vmatpush2.msra.mxu0 0.0
    %247 = vmatprep.subr.mxu0 0.0
    %248 = vmatpush2.msra.mxu0 0.0
    %249 = vmatprep.subr.mxu0 0.0
    %250 = vmatpush2.msra.mxu0 0.0
    %251 = vmatprep.subr.mxu0 0.0
    %252 = vmatpush2.msra.mxu0 0.0
    %253 = vmatprep.subr.mxu0 0.0
    %254 = vmatpush2.msra.mxu0 0.0
    %255 = vmatprep.subr.mxu0 0.0
    %256 = vmatpush2.msra.mxu0 0.0
    %257 = vmatprep.mubr.f32.mxu0 0.0
    %v258 = vand.u32 %v33, 4294901760
    %v259 = vsub.f32 %v33, %v258
    %260 = vmatmul.mubr.f32.gmra.mxu0 %v259
    %v261 = vpop.f32.mrf.mxu0
    %v262 = vadd.f32 %v188, %v261
    %v263 = vpop.f32.mrf.mxu0
    %264 = vdwg.mxu0
    %265 = vmatprep.subr.mxu0 0.0
    %266 = vmatpush1.msra.mxu0 0.0
    %267 = vmatprep.subr.mxu0 0.0
    %268 = vmatpush1.msra.mxu0 0.0
    %269 = vmatprep.subr.mxu0 0.0
    %270 = vmatpush1.msra.mxu0 0.0
    %271 = vmatprep.subr.mxu0 0.0
    %272 = vmatpush1.msra.mxu0 0.0
    %273 = vmatprep.subr.mxu0 0.0
    %274 = vmatpush1.msra.mxu0 0.0
    %275 = vmatprep.subr.mxu0 0.0
    %276 = vmatpush1.msra.mxu0 0.0
    %277 = vmatprep.subr.mxu0 0.0
    %278 = vmatpush1.msra.mxu0 0.0
    %279 = vmatprep.subr.mxu0 0.0
    %280 = vmatpush1.msra.mxu0 0.0
    %281 = vmatprep.subr.mxu0 0.0
    %282 = vmatpush1.msra.mxu0 0.0
    %283 = vmatprep.subr.mxu0 0.0
    %284 = vmatpush1.msra.mxu0 0.0
    %285 = vmatprep.subr.mxu0 0.0
    %286 = vmatpush1.msra.mxu0 0.0
    %287 = vmatprep.subr.mxu0 0.0
    %288 = vmatpush1.msra.mxu0 0.0
    %289 = vmatprep.subr.mxu0 0.0
    %290 = vmatpush1.msra.mxu0 0.0
    %291 = vmatprep.subr.mxu0 0.0
    %292 = vmatpush1.msra.mxu0 0.0
    %293 = vmatprep.subr.mxu0 0.0
    %294 = vmatpush1.msra.mxu0 0.0
    %295 = vmatprep.subr.mxu0 0.0
    %v296 = vand.u32 %v37, 4294901760
    %297 = vmatpush1.msra.mxu0 %v296
    %298 = vmatprep.subr.mxu0 0.0
    %299 = vmatpush2.msra.mxu0 0.0
    %300 = vmatprep.subr.mxu0 0.0
    %301 = vmatpush2.msra.mxu0 0.0
    %302 = vmatprep.subr.mxu0 0.0
    %303 = vmatpush2.msra.mxu0 0.0
    %304 = vmatprep.subr.mxu0 0.0
    %305 = vmatpush2.msra.mxu0 0.0
    %306 = vmatprep.subr.mxu0 0.0
    %307 = vmatpush2.msra.mxu0 0.0
    %308 = vmatprep.subr.mxu0 0.0
    %309 = vmatpush2.msra.mxu0 0.0
    %310 = vmatprep.subr.mxu0 0.0
    %311 = vmatpush2.msra.mxu0 0.0
    %312 = vmatprep.subr.mxu0 0.0
    %313 = vmatpush2.msra.mxu0 0.0
    %314 = vmatprep.subr.mxu0 0.0
    %315 = vmatpush2.msra.mxu0 0.0
    %316 = vmatprep.subr.mxu0 0.0
    %317 = vmatpush2.msra.mxu0 0.0
    %318 = vmatprep.subr.mxu0 0.0
    %319 = vmatpush2.msra.mxu0 0.0
    %320 = vmatprep.subr.mxu0 0.0
    %321 = vmatpush2.msra.mxu0 0.0
    %322 = vmatprep.subr.mxu0 0.0
    %323 = vmatpush2.msra.mxu0 0.0
    %324 = vmatprep.subr.mxu0 0.0
    %325 = vmatpush2.msra.mxu0 0.0
    %326 = vmatprep.subr.mxu0 0.0
    %327 = vmatpush2.msra.mxu0 0.0
    %328 = vmatprep.subr.mxu0 0.0
    %329 = vmatpush2.msra.mxu0 0.0
    %330 = vmatprep.mubr.f32.mxu0 0.0
    %v331 = vand.u32 %v33, 4294901760
    %v332 = vsub.f32 %v33, %v331
    %v333 = vand.u32 %v332, 4294901760
    %334 = vmatmul.mubr.f32.gmra.mxu0 %v333
    %v335 = vpop.f32.mrf.mxu0
    %v336 = vadd.f32 %v262, %v335
    %v337 = vpop.f32.mrf.mxu0
    %338 = vdwg.mxu0
    %339 = vmatprep.subr.mxu0 0.0
    %340 = vmatpush1.msra.mxu0 0.0
    %341 = vmatprep.subr.mxu0 0.0
    %342 = vmatpush1.msra.mxu0 0.0
    %343 = vmatprep.subr.mxu0 0.0
    %344 = vmatpush1.msra.mxu0 0.0
    %345 = vmatprep.subr.mxu0 0.0
    %346 = vmatpush1.msra.mxu0 0.0
    %347 = vmatprep.subr.mxu0 0.0
    %348 = vmatpush1.msra.mxu0 0.0
    %349 = vmatprep.subr.mxu0 0.0
    %350 = vmatpush1.msra.mxu0 0.0
    %351 = vmatprep.subr.mxu0 0.0
    %352 = vmatpush1.msra.mxu0 0.0
    %353 = vmatprep.subr.mxu0 0.0
    %354 = vmatpush1.msra.mxu0 0.0
    %355 = vmatprep.subr.mxu0 0.0
    %356 = vmatpush1.msra.mxu0 0.0
    %357 = vmatprep.subr.mxu0 0.0
    %358 = vmatpush1.msra.mxu0 0.0
    %359 = vmatprep.subr.mxu0 0.0
    %360 = vmatpush1.msra.mxu0 0.0
    %361 = vmatprep.subr.mxu0 0.0
    %362 = vmatpush1.msra.mxu0 0.0
    %363 = vmatprep.subr.mxu0 0.0
    %364 = vmatpush1.msra.mxu0 0.0
    %365 = vmatprep.subr.mxu0 0.0
    %366 = vmatpush1.msra.mxu0 0.0
    %367 = vmatprep.subr.mxu0 0.0
    %368 = vmatpush1.msra.mxu0 0.0
    %369 = vmatprep.subr.mxu0 0.0
    %v370 = vand.u32 %v37, 4294901760
    %v371 = vsub.f32 %v37, %v370
    %v372 = vand.u32 %v371, 4294901760
    %373 = vmatpush1.msra.mxu0 %v372
    %374 = vmatprep.subr.mxu0 0.0
    %375 = vmatpush2.msra.mxu0 0.0
    %376 = vmatprep.subr.mxu0 0.0
    %377 = vmatpush2.msra.mxu0 0.0
    %378 = vmatprep.subr.mxu0 0.0
    %379 = vmatpush2.msra.mxu0 0.0
    %380 = vmatprep.subr.mxu0 0.0
    %381 = vmatpush2.msra.mxu0 0.0
    %382 = vmatprep.subr.mxu0 0.0
    %383 = vmatpush2.msra.mxu0 0.0
    %384 = vmatprep.subr.mxu0 0.0
    %385 = vmatpush2.msra.mxu0 0.0
    %386 = vmatprep.subr.mxu0 0.0
    %387 = vmatpush2.msra.mxu0 0.0
    %388 = vmatprep.subr.mxu0 0.0
    %389 = vmatpush2.msra.mxu0 0.0
    %390 = vmatprep.subr.mxu0 0.0
    %391 = vmatpush2.msra.mxu0 0.0
    %392 = vmatprep.subr.mxu0 0.0
    %393 = vmatpush2.msra.mxu0 0.0
    %394 = vmatprep.subr.mxu0 0.0
    %395 = vmatpush2.msra.mxu0 0.0
    %396 = vmatprep.subr.mxu0 0.0
    %397 = vmatpush2.msra.mxu0 0.0
    %398 = vmatprep.subr.mxu0 0.0
    %399 = vmatpush2.msra.mxu0 0.0
    %400 = vmatprep.subr.mxu0 0.0
    %401 = vmatpush2.msra.mxu0 0.0
    %402 = vmatprep.subr.mxu0 0.0
    %403 = vmatpush2.msra.mxu0 0.0
    %404 = vmatprep.subr.mxu0 0.0
    %405 = vmatpush2.msra.mxu0 0.0
    %406 = vmatprep.mubr.f32.mxu0 0.0
    %v407 = vand.u32 %v33, 4294901760
    %408 = vmatmul.mubr.f32.gmra.mxu0 %v407
    %v409 = vpop.f32.mrf.mxu0
    %v410 = vadd.f32 %v336, %v409
    %v411 = vpop.f32.mrf.mxu0
    %412 = vdwg.mxu0
    %413 = vmatprep.subr.mxu0 0.0
    %414 = vmatpush1.msra.mxu0 0.0
    %415 = vmatprep.subr.mxu0 0.0
    %416 = vmatpush1.msra.mxu0 0.0
    %417 = vmatprep.subr.mxu0 0.0
    %418 = vmatpush1.msra.mxu0 0.0
    %419 = vmatprep.subr.mxu0 0.0
    %420 = vmatpush1.msra.mxu0 0.0
    %421 = vmatprep.subr.mxu0 0.0
    %422 = vmatpush1.msra.mxu0 0.0
    %423 = vmatprep.subr.mxu0 0.0
    %424 = vmatpush1.msra.mxu0 0.0
    %425 = vmatprep.subr.mxu0 0.0
    %426 = vmatpush1.msra.mxu0 0.0
    %427 = vmatprep.subr.mxu0 0.0
    %428 = vmatpush1.msra.mxu0 0.0
    %429 = vmatprep.subr.mxu0 0.0
    %430 = vmatpush1.msra.mxu0 0.0
    %431 = vmatprep.subr.mxu0 0.0
    %432 = vmatpush1.msra.mxu0 0.0
    %433 = vmatprep.subr.mxu0 0.0
    %434 = vmatpush1.msra.mxu0 0.0
    %435 = vmatprep.subr.mxu0 0.0
    %436 = vmatpush1.msra.mxu0 0.0
    %437 = vmatprep.subr.mxu0 0.0
    %438 = vmatpush1.msra.mxu0 0.0
    %439 = vmatprep.subr.mxu0 0.0
    %440 = vmatpush1.msra.mxu0 0.0
    %441 = vmatprep.subr.mxu0 0.0
    %442 = vmatpush1.msra.mxu0 0.0
    %443 = vmatprep.subr.mxu0 0.0
    %v444 = vand.u32 %v37, 4294901760
    %445 = vmatpush1.msra.mxu0 %v444
    %446 = vmatprep.subr.mxu0 0.0
    %447 = vmatpush2.msra.mxu0 0.0
    %448 = vmatprep.subr.mxu0 0.0
    %449 = vmatpush2.msra.mxu0 0.0
    %450 = vmatprep.subr.mxu0 0.0
    %451 = vmatpush2.msra.mxu0 0.0
    %452 = vmatprep.subr.mxu0 0.0
    %453 = vmatpush2.msra.mxu0 0.0
    %454 = vmatprep.subr.mxu0 0.0
    %455 = vmatpush2.msra.mxu0 0.0
    %456 = vmatprep.subr.mxu0 0.0
    %457 = vmatpush2.msra.mxu0 0.0
    %458 = vmatprep.subr.mxu0 0.0
    %459 = vmatpush2.msra.mxu0 0.0
    %460 = vmatprep.subr.mxu0 0.0
    %461 = vmatpush2.msra.mxu0 0.0
    %462 = vmatprep.subr.mxu0 0.0
    %463 = vmatpush2.msra.mxu0 0.0
    %464 = vmatprep.subr.mxu0 0.0
    %465 = vmatpush2.msra.mxu0 0.0
    %466 = vmatprep.subr.mxu0 0.0
    %467 = vmatpush2.msra.mxu0 0.0
    %468 = vmatprep.subr.mxu0 0.0
    %469 = vmatpush2.msra.mxu0 0.0
    %470 = vmatprep.subr.mxu0 0.0
    %471 = vmatpush2.msra.mxu0 0.0
    %472 = vmatprep.subr.mxu0 0.0
    %473 = vmatpush2.msra.mxu0 0.0
    %474 = vmatprep.subr.mxu0 0.0
    %475 = vmatpush2.msra.mxu0 0.0
    %476 = vmatprep.subr.mxu0 0.0
    %477 = vmatpush2.msra.mxu0 0.0
    %478 = vmatprep.mubr.f32.mxu0 0.0
    %v479 = vand.u32 %v33, 4294901760
    %480 = vmatmul.mubr.f32.gmra.mxu0 %v479
    %v481 = vpop.f32.mrf.mxu0
    %v482 = vadd.f32 %v410, %v481
    %v483 = vpop.f32.mrf.mxu0
    %484 = vdwg.mxu0
    %v486 = vsel %vm31, %v18, 0
    %v489 = vsel %vm35, %v16, 0
    %491 = vmatprep.subr.mxu0 0.0
    %492 = vmatpush1.msra.mxu0 0.0
    %493 = vmatprep.subr.mxu0 0.0
    %494 = vmatpush1.msra.mxu0 0.0
    %495 = vmatprep.subr.mxu0 0.0
    %496 = vmatpush1.msra.mxu0 0.0
    %497 = vmatprep.subr.mxu0 0.0
    %498 = vmatpush1.msra.mxu0 0.0
    %499 = vmatprep.subr.mxu0 0.0
    %500 = vmatpush1.msra.mxu0 0.0
    %501 = vmatprep.subr.mxu0 0.0
    %502 = vmatpush1.msra.mxu0 0.0
    %503 = vmatprep.subr.mxu0 0.0
    %504 = vmatpush1.msra.mxu0 0.0
    %505 = vmatprep.subr.mxu0 0.0
    %506 = vmatpush1.msra.mxu0 0.0
    %507 = vmatprep.subr.mxu0 0.0
    %508 = vmatpush1.msra.mxu0 0.0
    %509 = vmatprep.subr.mxu0 0.0
    %510 = vmatpush1.msra.mxu0 0.0
    %511 = vmatprep.subr.mxu0 0.0
    %512 = vmatpush1.msra.mxu0 0.0
    %513 = vmatprep.subr.mxu0 0.0
    %514 = vmatpush1.msra.mxu0 0.0
    %515 = vmatprep.subr.mxu0 0.0
    %516 = vmatpush1.msra.mxu0 0.0
    %517 = vmatprep.subr.mxu0 0.0
    %518 = vmatpush1.msra.mxu0 0.0
    %519 = vmatprep.subr.mxu0 0.0
    %520 = vmatpush1.msra.mxu0 0.0
    %521 = vmatprep.subr.mxu0 0.0
    %v522 = vand.u32 %v489, 4294901760
    %523 = vmatpush1.msra.mxu0 %v522
    %524 = vmatprep.subr.mxu0 0.0
    %525 = vmatpush2.msra.mxu0 0.0
    %526 = vmatprep.subr.mxu0 0.0
    %527 = vmatpush2.msra.mxu0 0.0
    %528 = vmatprep.subr.mxu0 0.0
    %529 = vmatpush2.msra.mxu0 0.0
    %530 = vmatprep.subr.mxu0 0.0
    %531 = vmatpush2.msra.mxu0 0.0
    %532 = vmatprep.subr.mxu0 0.0
    %533 = vmatpush2.msra.mxu0 0.0
    %534 = vmatprep.subr.mxu0 0.0
    %535 = vmatpush2.msra.mxu0 0.0
    %536 = vmatprep.subr.mxu0 0.0
    %537 = vmatpush2.msra.mxu0 0.0
    %538 = vmatprep.subr.mxu0 0.0
    %539 = vmatpush2.msra.mxu0 0.0
    %540 = vmatprep.subr.mxu0 0.0
    %541 = vmatpush2.msra.mxu0 0.0
    %542 = vmatprep.subr.mxu0 0.0
    %543 = vmatpush2.msra.mxu0 0.0
    %544 = vmatprep.subr.mxu0 0.0
    %545 = vmatpush2.msra.mxu0 0.0
    %546 = vmatprep.subr.mxu0 0.0
    %547 = vmatpush2.msra.mxu0 0.0
    %548 = vmatprep.subr.mxu0 0.0
    %549 = vmatpush2.msra.mxu0 0.0
    %550 = vmatprep.subr.mxu0 0.0
    %551 = vmatpush2.msra.mxu0 0.0
    %552 = vmatprep.subr.mxu0 0.0
    %553 = vmatpush2.msra.mxu0 0.0
    %554 = vmatprep.subr.mxu0 0.0
    %555 = vmatpush2.msra.mxu0 0.0
    %556 = vmatprep.mubr.f32.mxu0 0.0
    %v557 = vand.u32 %v486, 4294901760
    %v558 = vsub.f32 %v486, %v557
    %v559 = vand.u32 %v558, 4294901760
    %v560 = vsub.f32 %v558, %v559
    %v561 = vand.u32 %v560, 4294901760
    %562 = vmatmul.mubr.f32.gmra.mxu0 %v561
    %v563 = vpop.f32.mrf.mxu0
    %v564 = vadd.f32 %v29, %v563
    %v565 = vpop.f32.mrf.mxu0
    %566 = vdwg.mxu0
    %567 = vmatprep.subr.mxu0 0.0
    %568 = vmatpush1.msra.mxu0 0.0
    %569 = vmatprep.subr.mxu0 0.0
    %570 = vmatpush1.msra.mxu0 0.0
    %571 = vmatprep.subr.mxu0 0.0
    %572 = vmatpush1.msra.mxu0 0.0
    %573 = vmatprep.subr.mxu0 0.0
    %574 = vmatpush1.msra.mxu0 0.0
    %575 = vmatprep.subr.mxu0 0.0
    %576 = vmatpush1.msra.mxu0 0.0
    %577 = vmatprep.subr.mxu0 0.0
    %578 = vmatpush1.msra.mxu0 0.0
    %579 = vmatprep.subr.mxu0 0.0
    %580 = vmatpush1.msra.mxu0 0.0
    %581 = vmatprep.subr.mxu0 0.0
    %582 = vmatpush1.msra.mxu0 0.0
    %583 = vmatprep.subr.mxu0 0.0
    %584 = vmatpush1.msra.mxu0 0.0
    %585 = vmatprep.subr.mxu0 0.0
    %586 = vmatpush1.msra.mxu0 0.0
    %587 = vmatprep.subr.mxu0 0.0
    %588 = vmatpush1.msra.mxu0 0.0
    %589 = vmatprep.subr.mxu0 0.0
    %590 = vmatpush1.msra.mxu0 0.0
    %591 = vmatprep.subr.mxu0 0.0
    %592 = vmatpush1.msra.mxu0 0.0
    %593 = vmatprep.subr.mxu0 0.0
    %594 = vmatpush1.msra.mxu0 0.0
    %595 = vmatprep.subr.mxu0 0.0
    %596 = vmatpush1.msra.mxu0 0.0
    %597 = vmatprep.subr.mxu0 0.0
    %v598 = vand.u32 %v489, 4294901760
    %v599 = vsub.f32 %v489, %v598
    %v600 = vand.u32 %v599, 4294901760
    %v601 = vsub.f32 %v599, %v600
    %v602 = vand.u32 %v601, 4294901760
    %603 = vmatpush1.msra.mxu0 %v602
    %604 = vmatprep.subr.mxu0 0.0
    %605 = vmatpush2.msra.mxu0 0.0
    %606 = vmatprep.subr.mxu0 0.0
    %607 = vmatpush2.msra.mxu0 0.0
    %608 = vmatprep.subr.mxu0 0.0
    %609 = vmatpush2.msra.mxu0 0.0
    %610 = vmatprep.subr.mxu0 0.0
    %611 = vmatpush2.msra.mxu0 0.0
    %612 = vmatprep.subr.mxu0 0.0
    %613 = vmatpush2.msra.mxu0 0.0
    %614 = vmatprep.subr.mxu0 0.0
    %615 = vmatpush2.msra.mxu0 0.0
    %616 = vmatprep.subr.mxu0 0.0
    %617 = vmatpush2.msra.mxu0 0.0
    %618 = vmatprep.subr.mxu0 0.0
    %619 = vmatpush2.msra.mxu0 0.0
    %620 = vmatprep.subr.mxu0 0.0
    %621 = vmatpush2.msra.mxu0 0.0
    %622 = vmatprep.subr.mxu0 0.0
    %623 = vmatpush2.msra.mxu0 0.0
    %624 = vmatprep.subr.mxu0 0.0
    %625 = vmatpush2.msra.mxu0 0.0
    %626 = vmatprep.subr.mxu0 0.0
    %627 = vmatpush2.msra.mxu0 0.0
    %628 = vmatprep.subr.mxu0 0.0
    %629 = vmatpush2.msra.mxu0 0.0
    %630 = vmatprep.subr.mxu0 0.0
    %631 = vmatpush2.msra.mxu0 0.0
    %632 = vmatprep.subr.mxu0 0.0
    %633 = vmatpush2.msra.mxu0 0.0
    %634 = vmatprep.subr.mxu0 0.0
    %635 = vmatpush2.msra.mxu0 0.0
    %636 = vmatprep.mubr.f32.mxu0 0.0
    %v637 = vand.u32 %v486, 4294901760
    %638 = vmatmul.mubr.f32.gmra.mxu0 %v637
    %v639 = vpop.f32.mrf.mxu0
    %v640 = vadd.f32 %v564, %v639
    %v641 = vpop.f32.mrf.mxu0
    %642 = vdwg.mxu0
    %643 = vmatprep.subr.mxu0 0.0
    %644 = vmatpush1.msra.mxu0 0.0
    %645 = vmatprep.subr.mxu0 0.0
    %646 = vmatpush1.msra.mxu0 0.0
    %647 = vmatprep.subr.mxu0 0.0
    %648 = vmatpush1.msra.mxu0 0.0
    %649 = vmatprep.subr.mxu0 0.0
    %650 = vmatpush1.msra.mxu0 0.0
    %651 = vmatprep.subr.mxu0 0.0
    %652 = vmatpush1.msra.mxu0 0.0
    %653 = vmatprep.subr.mxu0 0.0
    %654 = vmatpush1.msra.mxu0 0.0
    %655 = vmatprep.subr.mxu0 0.0
    %656 = vmatpush1.msra.mxu0 0.0
    %657 = vmatprep.subr.mxu0 0.0
    %658 = vmatpush1.msra.mxu0 0.0
    %659 = vmatprep.subr.mxu0 0.0
    %660 = vmatpush1.msra.mxu0 0.0
    %661 = vmatprep.subr.mxu0 0.0
    %662 = vmatpush1.msra.mxu0 0.0
    %663 = vmatprep.subr.mxu0 0.0
    %664 = vmatpush1.msra.mxu0 0.0
    %665 = vmatprep.subr.mxu0 0.0
    %666 = vmatpush1.msra.mxu0 0.0
    %667 = vmatprep.subr.mxu0 0.0
    %668 = vmatpush1.msra.mxu0 0.0
    %669 = vmatprep.subr.mxu0 0.0
    %670 = vmatpush1.msra.mxu0 0.0
    %671 = vmatprep.subr.mxu0 0.0
    %672 = vmatpush1.msra.mxu0 0.0
    %673 = vmatprep.subr.mxu0 0.0
    %v674 = vand.u32 %v489, 4294901760
    %v675 = vsub.f32 %v489, %v674
    %676 = vmatpush1.msra.mxu0 %v675
    %677 = vmatprep.subr.mxu0 0.0
    %678 = vmatpush2.msra.mxu0 0.0
    %679 = vmatprep.subr.mxu0 0.0
    %680 = vmatpush2.msra.mxu0 0.0
    %681 = vmatprep.subr.mxu0 0.0
    %682 = vmatpush2.msra.mxu0 0.0
    %683 = vmatprep.subr.mxu0 0.0
    %684 = vmatpush2.msra.mxu0 0.0
    %685 = vmatprep.subr.mxu0 0.0
    %686 = vmatpush2.msra.mxu0 0.0
    %687 = vmatprep.subr.mxu0 0.0
    %688 = vmatpush2.msra.mxu0 0.0
    %689 = vmatprep.subr.mxu0 0.0
    %690 = vmatpush2.msra.mxu0 0.0
    %691 = vmatprep.subr.mxu0 0.0
    %692 = vmatpush2.msra.mxu0 0.0
    %693 = vmatprep.subr.mxu0 0.0
    %694 = vmatpush2.msra.mxu0 0.0
    %695 = vmatprep.subr.mxu0 0.0
    %696 = vmatpush2.msra.mxu0 0.0
    %697 = vmatprep.subr.mxu0 0.0
    %698 = vmatpush2.msra.mxu0 0.0
    %699 = vmatprep.subr.mxu0 0.0
    %700 = vmatpush2.msra.mxu0 0.0
    %701 = vmatprep.subr.mxu0 0.0
    %702 = vmatpush2.msra.mxu0 0.0
    %703 = vmatprep.subr.mxu0 0.0
    %704 = vmatpush2.msra.mxu0 0.0
    %705 = vmatprep.subr.mxu0 0.0
    %706 = vmatpush2.msra.mxu0 0.0
    %707 = vmatprep.subr.mxu0 0.0
    %708 = vmatpush2.msra.mxu0 0.0
    %709 = vmatprep.mubr.f32.mxu0 0.0
    %v710 = vand.u32 %v486, 4294901760
    %v711 = vsub.f32 %v486, %v710
    %712 = vmatmul.mubr.f32.gmra.mxu0 %v711
    %v713 = vpop.f32.mrf.mxu0
    %v714 = vadd.f32 %v640, %v713
    %v715 = vpop.f32.mrf.mxu0
    %716 = vdwg.mxu0
    %717 = vmatprep.subr.mxu0 0.0
    %718 = vmatpush1.msra.mxu0 0.0
    %719 = vmatprep.subr.mxu0 0.0
    %720 = vmatpush1.msra.mxu0 0.0
    %721 = vmatprep.subr.mxu0 0.0
    %722 = vmatpush1.msra.mxu0 0.0
    %723 = vmatprep.subr.mxu0 0.0
    %724 = vmatpush1.msra.mxu0 0.0
    %725 = vmatprep.subr.mxu0 0.0
    %726 = vmatpush1.msra.mxu0 0.0
    %727 = vmatprep.subr.mxu0 0.0
    %728 = vmatpush1.msra.mxu0 0.0
    %729 = vmatprep.subr.mxu0 0.0
    %730 = vmatpush1.msra.mxu0 0.0
    %731 = vmatprep.subr.mxu0 0.0
    %732 = vmatpush1.msra.mxu0 0.0
    %733 = vmatprep.subr.mxu0 0.0
    %734 = vmatpush1.msra.mxu0 0.0
    %735 = vmatprep.subr.mxu0 0.0
    %736 = vmatpush1.msra.mxu0 0.0
    %737 = vmatprep.subr.mxu0 0.0
    %738 = vmatpush1.msra.mxu0 0.0
    %739 = vmatprep.subr.mxu0 0.0
    %740 = vmatpush1.msra.mxu0 0.0
    %741 = vmatprep.subr.mxu0 0.0
    %742 = vmatpush1.msra.mxu0 0.0
    %743 = vmatprep.subr.mxu0 0.0
    %744 = vmatpush1.msra.mxu0 0.0
    %745 = vmatprep.subr.mxu0 0.0
    %746 = vmatpush1.msra.mxu0 0.0
    %747 = vmatprep.subr.mxu0 0.0
    %v748 = vand.u32 %v489, 4294901760
    %749 = vmatpush1.msra.mxu0 %v748
    %750 = vmatprep.subr.mxu0 0.0
    %751 = vmatpush2.msra.mxu0 0.0
    %752 = vmatprep.subr.mxu0 0.0
    %753 = vmatpush2.msra.mxu0 0.0
    %754 = vmatprep.subr.mxu0 0.0
    %755 = vmatpush2.msra.mxu0 0.0
    %756 = vmatprep.subr.mxu0 0.0
    %757 = vmatpush2.msra.mxu0 0.0
    %758 = vmatprep.subr.mxu0 0.0
    %759 = vmatpush2.msra.mxu0 0.0
    %760 = vmatprep.subr.mxu0 0.0
    %761 = vmatpush2.msra.mxu0 0.0
    %762 = vmatprep.subr.mxu0 0.0
    %763 = vmatpush2.msra.mxu0 0.0
    %764 = vmatprep.subr.mxu0 0.0
    %765 = vmatpush2.msra.mxu0 0.0
    %766 = vmatprep.subr.mxu0 0.0
    %767 = vmatpush2.msra.mxu0 0.0
    %768 = vmatprep.subr.mxu0 0.0
    %769 = vmatpush2.msra.mxu0 0.0
    %770 = vmatprep.subr.mxu0 0.0
    %771 = vmatpush2.msra.mxu0 0.0
    %772 = vmatprep.subr.mxu0 0.0
    %773 = vmatpush2.msra.mxu0 0.0
    %774 = vmatprep.subr.mxu0 0.0
    %775 = vmatpush2.msra.mxu0 0.0
    %776 = vmatprep.subr.mxu0 0.0
    %777 = vmatpush2.msra.mxu0 0.0
    %778 = vmatprep.subr.mxu0 0.0
    %779 = vmatpush2.msra.mxu0 0.0
    %780 = vmatprep.subr.mxu0 0.0
    %781 = vmatpush2.msra.mxu0 0.0
    %782 = vmatprep.mubr.f32.mxu0 0.0
    %v783 = vand.u32 %v486, 4294901760
    %v784 = vsub.f32 %v486, %v783
    %v785 = vand.u32 %v784, 4294901760
    %786 = vmatmul.mubr.f32.gmra.mxu0 %v785
    %v787 = vpop.f32.mrf.mxu0
    %v788 = vadd.f32 %v714, %v787
    %v789 = vpop.f32.mrf.mxu0
    %790 = vdwg.mxu0
    %791 = vmatprep.subr.mxu0 0.0
    %792 = vmatpush1.msra.mxu0 0.0
    %793 = vmatprep.subr.mxu0 0.0
    %794 = vmatpush1.msra.mxu0 0.0
    %795 = vmatprep.subr.mxu0 0.0
    %796 = vmatpush1.msra.mxu0 0.0
    %797 = vmatprep.subr.mxu0 0.0
    %798 = vmatpush1.msra.mxu0 0.0
    %799 = vmatprep.subr.mxu0 0.0
    %800 = vmatpush1.msra.mxu0 0.0
    %801 = vmatprep.subr.mxu0 0.0
    %802 = vmatpush1.msra.mxu0 0.0
    %803 = vmatprep.subr.mxu0 0.0
    %804 = vmatpush1.msra.mxu0 0.0
    %805 = vmatprep.subr.mxu0 0.0
    %806 = vmatpush1.msra.mxu0 0.0
    %807 = vmatprep.subr.mxu0 0.0
    %808 = vmatpush1.msra.mxu0 0.0
    %809 = vmatprep.subr.mxu0 0.0
    %810 = vmatpush1.msra.mxu0 0.0
    %811 = vmatprep.subr.mxu0 0.0
    %812 = vmatpush1.msra.mxu0 0.0
    %813 = vmatprep.subr.mxu0 0.0
    %814 = vmatpush1.msra.mxu0 0.0
    %815 = vmatprep.subr.mxu0 0.0
    %816 = vmatpush1.msra.mxu0 0.0
    %817 = vmatprep.subr.mxu0 0.0
    %818 = vmatpush1.msra.mxu0 0.0
    %819 = vmatprep.subr.mxu0 0.0
    %820 = vmatpush1.msra.mxu0 0.0
    %821 = vmatprep.subr.mxu0 0.0
    %v822 = vand.u32 %v489, 4294901760
    %v823 = vsub.f32 %v489, %v822
    %v824 = vand.u32 %v823, 4294901760
    %825 = vmatpush1.msra.mxu0 %v824
    %826 = vmatprep.subr.mxu0 0.0
    %827 = vmatpush2.msra.mxu0 0.0
    %828 = vmatprep.subr.mxu0 0.0
    %829 = vmatpush2.msra.mxu0 0.0
    %830 = vmatprep.subr.mxu0 0.0
    %831 = vmatpush2.msra.mxu0 0.0
    %832 = vmatprep.subr.mxu0 0.0
    %833 = vmatpush2.msra.mxu0 0.0
    %834 = vmatprep.subr.mxu0 0.0
    %835 = vmatpush2.msra.mxu0 0.0
    %836 = vmatprep.subr.mxu0 0.0
    %837 = vmatpush2.msra.mxu0 0.0
    %838 = vmatprep.subr.mxu0 0.0
    %839 = vmatpush2.msra.mxu0 0.0
    %840 = vmatprep.subr.mxu0 0.0
    %841 = vmatpush2.msra.mxu0 0.0
    %842 = vmatprep.subr.mxu0 0.0
    %843 = vmatpush2.msra.mxu0 0.0
    %844 = vmatprep.subr.mxu0 0.0
    %845 = vmatpush2.msra.mxu0 0.0
    %846 = vmatprep.subr.mxu0 0.0
    %847 = vmatpush2.msra.mxu0 0.0
    %848 = vmatprep.subr.mxu0 0.0
    %849 = vmatpush2.msra.mxu0 0.0
    %850 = vmatprep.subr.mxu0 0.0
    %851 = vmatpush2.msra.mxu0 0.0
    %852 = vmatprep.subr.mxu0 0.0
    %853 = vmatpush2.msra.mxu0 0.0
    %854 = vmatprep.subr.mxu0 0.0
    %855 = vmatpush2.msra.mxu0 0.0
    %856 = vmatprep.subr.mxu0 0.0
    %857 = vmatpush2.msra.mxu0 0.0
    %858 = vmatprep.mubr.f32.mxu0 0.0
    %v859 = vand.u32 %v486, 4294901760
    %860 = vmatmul.mubr.f32.gmra.mxu0 %v859
    %v861 = vpop.f32.mrf.mxu0
    %v862 = vadd.f32 %v788, %v861
    %v863 = vpop.f32.mrf.mxu0
    %864 = vdwg.mxu0
    %865 = vmatprep.subr.mxu0 0.0
    %866 = vmatpush1.msra.mxu0 0.0
    %867 = vmatprep.subr.mxu0 0.0
    %868 = vmatpush1.msra.mxu0 0.0
    %869 = vmatprep.subr.mxu0 0.0
    %870 = vmatpush1.msra.mxu0 0.0
    %871 = vmatprep.subr.mxu0 0.0
    %872 = vmatpush1.msra.mxu0 0.0
    %873 = vmatprep.subr.mxu0 0.0
    %874 = vmatpush1.msra.mxu0 0.0
    %875 = vmatprep.subr.mxu0 0.0
    %876 = vmatpush1.msra.mxu0 0.0
    %877 = vmatprep.subr.mxu0 0.0
    %878 = vmatpush1.msra.mxu0 0.0
    %879 = vmatprep.subr.mxu0 0.0
    %880 = vmatpush1.msra.mxu0 0.0
    %881 = vmatprep.subr.mxu0 0.0
    %882 = vmatpush1.msra.mxu0 0.0
    %883 = vmatprep.subr.mxu0 0.0
    %884 = vmatpush1.msra.mxu0 0.0
    %885 = vmatprep.subr.mxu0 0.0
    %886 = vmatpush1.msra.mxu0 0.0
    %887 = vmatprep.subr.mxu0 0.0
    %888 = vmatpush1.msra.mxu0 0.0
    %889 = vmatprep.subr.mxu0 0.0
    %890 = vmatpush1.msra.mxu0 0.0
    %891 = vmatprep.subr.mxu0 0.0
    %892 = vmatpush1.msra.mxu0 0.0
    %893 = vmatprep.subr.mxu0 0.0
    %894 = vmatpush1.msra.mxu0 0.0
    %895 = vmatprep.subr.mxu0 0.0
    %v896 = vand.u32 %v489, 4294901760
    %897 = vmatpush1.msra.mxu0 %v896
    %898 = vmatprep.subr.mxu0 0.0
    %899 = vmatpush2.msra.mxu0 0.0
    %900 = vmatprep.subr.mxu0 0.0
    %901 = vmatpush2.msra.mxu0 0.0
    %902 = vmatprep.subr.mxu0 0.0
    %903 = vmatpush2.msra.mxu0 0.0
    %904 = vmatprep.subr.mxu0 0.0
    %905 = vmatpush2.msra.mxu0 0.0
    %906 = vmatprep.subr.mxu0 0.0
    %907 = vmatpush2.msra.mxu0 0.0
    %908 = vmatprep.subr.mxu0 0.0
    %909 = vmatpush2.msra.mxu0 0.0
    %910 = vmatprep.subr.mxu0 0.0
    %911 = vmatpush2.msra.mxu0 0.0
    %912 = vmatprep.subr.mxu0 0.0
    %913 = vmatpush2.msra.mxu0 0.0
    %914 = vmatprep.subr.mxu0 0.0
    %915 = vmatpush2.msra.mxu0 0.0
    %916 = vmatprep.subr.mxu0 0.0
    %917 = vmatpush2.msra.mxu0 0.0
    %918 = vmatprep.subr.mxu0 0.0
    %919 = vmatpush2.msra.mxu0 0.0
    %920 = vmatprep.subr.mxu0 0.0
    %921 = vmatpush2.msra.mxu0 0.0
    %922 = vmatprep.subr.mxu0 0.0
    %923 = vmatpush2.msra.mxu0 0.0
    %924 = vmatprep.subr.mxu0 0.0
    %925 = vmatpush2.msra.mxu0 0.0
    %926 = vmatprep.subr.mxu0 0.0
    %927 = vmatpush2.msra.mxu0 0.0
    %928 = vmatprep.subr.mxu0 0.0
    %929 = vmatpush2.msra.mxu0 0.0
    %930 = vmatprep.mubr.f32.mxu0 0.0
    %v931 = vand.u32 %v486, 4294901760
    %932 = vmatmul.mubr.f32.gmra.mxu0 %v931
    %v933 = vpop.f32.mrf.mxu0
    %v934 = vadd.f32 %v862, %v933
    %v935 = vpop.f32.mrf.mxu0
    %936 = vdwg.mxu0
    %vm937 = vcmask 130048
    %938 = vst.msk [vmem:[#allocation2] sm:$0xff] %vm937, %v482
    %939 = vst.msk [vmem:[#allocation2 + $0x8] sm:$0xff] %vm937, %v934
    // Predicated region
    $region14: #{tpu_custom_call.1} parent=1 // pred_check
      _
    $region15: #{tpu_custom_call.1} parent=1 // pred_check_branch
      %941 = sbr.rel (0) target = $region17
    $region16: #{tpu_custom_call.1} parent=1 // pred_region
      %s943 = ssub.s32 256, 256
      %944 = vsyncadd [#allocation3], %s943
      %s945 = sshll.u32 [#allocation2], 4
      %s946 = int_to_ptr.vmem [resolvable:$true] %s945
      %951 = dma.vmem_to_hbm [thread:$0]  %s946, 256, %s3, [#allocation3], 128, 128, 8
    $region17: #{tpu_custom_call.1} parent=1 // pred_fallthru
      _
    // Predicated region
    $region18: #{tpu_custom_call.1} parent=1 // pred_check
      _
    $region19: #{tpu_custom_call.1} parent=1 // pred_check_branch
      %953 = sbr.rel (0) target = $region21
    $region20: #{tpu_custom_call.1} parent=1 // pred_region
      %954 = dma.done [#allocation3], 256
    $region21: #{tpu_custom_call.1} parent=1 // pred_fallthru
      _
    %955 = vsyncpa [#allocation3], 1

</llo_original>
